<compile_context>
chip_gen: v7x
topology: tpu7x:2x2x1
jax: 0.10.0
libtpu: 0.0.40
codegen_flags: <defaults>
</compile_context>

<pallas_src>
import functools

import jax
import jax.numpy as jnp
from jax import lax
from jax.experimental import pallas as pl
from jax.experimental.pallas import tpu as pltpu


_LANES = 128
_MAX_TILE_BYTES = 4 * 1024 * 1024       # per input, per pipeline buffer
_VMEM_LIMIT_BYTES = 48 * 1024 * 1024    # 2 in x 2 bufs x 4 MiB + f32 temporaries


def _cdiv(a, b):
    return (a + b - 1) // b


def _round_up(a, b):
    return _cdiv(a, b) * b


def _num_splits_and_semantics():
    """2-way CORE_PARALLEL split only on v7x (2 TCs/chip); 1-D grid elsewhere."""
    try:
        kind = jax.devices()[0].device_kind.lower()
    except Exception:
        kind = ""
    core_parallel = getattr(pltpu, "CORE_PARALLEL", None)
    if ("v7" in kind or "7x" in kind) and core_parallel is not None:
        return 2, core_parallel
    return 1, None


def _sq_diff_sum_kernel(recon_ref, x_ref, out_ref, *, rows, tile_rows,
                        tiles_per_split, needs_row_mask, two_splits):
    if two_splits:
        c = pl.program_id(0)
        i = pl.program_id(1)
    else:
        c = 0
        i = pl.program_id(0)

    @pl.when(i == 0)
    def _init():
        out_ref[...] = jnp.zeros_like(out_ref)

    # Steady state: streaming squared difference (f32 upcast in-kernel, hidden
    # under the DMA), reduced per vreg column so the only cross-lane reduction
    # happens once, in the wrapper.
    d = recon_ref[...].astype(jnp.float32) - x_ref[...].astype(jnp.float32)
    sq = d * d
    if needs_row_mask:
        # Statically-known ragged tiling: zero rows past the end of the slab
        # (their VMEM contents are unspecified).
        start = (c * tiles_per_split + i) * tile_rows
        row_ids = lax.broadcasted_iota(jnp.int32, sq.shape, 0)
        sq = jnp.where(row_ids < (rows - start), sq, 0.0)
    out_ref[...] += jnp.sum(sq.reshape(-1, 8, _LANES), axis=0)[None]


def uvae_criterion(recon_x, x, mu, logvar, x_sigma=1.0):
    """Pallas implementation of UVAECriterion.forward. Returns a scalar f32."""
    batch_size = x.shape[0]
    inv_denom = 1.0 / (float(x_sigma) ** 2 * float(batch_size))

    flat_r = recon_x.reshape(-1)
    flat_x = x.reshape(-1)
    n = flat_x.shape[0]
    rows = _cdiv(n, _LANES)
    lane_pad = rows * _LANES - n
    if lane_pad:
        # Only when x.size is not a multiple of 128: pad < 128 zeros (they add
        # exactly 0 to the squared-difference sum).  Common case: no copy.
        flat_r = jnp.pad(flat_r, (0, lane_pad))
        flat_x = jnp.pad(flat_x, (0, lane_pad))
    recon2d = flat_r.reshape(rows, _LANES)   # pure reshape: no HBM copy
    x2d = flat_x.reshape(rows, _LANES)

    itemsize = jnp.dtype(x2d.dtype).itemsize
    sub_mult = max(8, 32 // itemsize)                   # 8 f32 / 16 bf16 / 32 i8
    max_rows = _MAX_TILE_BYTES // (_LANES * itemsize)   # 8192 / 16384 / 32768

    n_splits, split_sem = _num_splits_and_semantics()
    tile_rows = min(max_rows,
                    _round_up(max(1, _cdiv(rows, n_splits)), sub_mult))
    total_tiles = _cdiv(rows, tile_rows)
    tiles_per_split = _cdiv(total_tiles, n_splits)
    needs_row_mask = (n_splits * tiles_per_split * tile_rows != rows)

    kernel = functools.partial(
        _sq_diff_sum_kernel, rows=rows, tile_rows=tile_rows,
        tiles_per_split=tiles_per_split, needs_row_mask=needs_row_mask,
        two_splits=(n_splits > 1))

    if n_splits > 1:
        grid = (n_splits, tiles_per_split)
        # Clamp so a trailing out-of-range step (odd tile count) re-reads the
        # last in-bounds block; the row mask zeroes its contribution.
        in_idx = lambda c, i: (jnp.minimum(c * tiles_per_split + i,
                                           total_tiles - 1), 0)
        out_idx = lambda c, i: (c, 0, 0)
        dim_sem = (split_sem, pltpu.ARBITRARY)
    else:
        grid = (tiles_per_split,)
        in_idx = lambda i: (i, 0)
        out_idx = lambda i: (0, 0, 0)
        dim_sem = (pltpu.ARBITRARY,)

    big_spec = pl.BlockSpec((tile_rows, _LANES), in_idx)

    bytes_accessed = int(recon2d.size * recon2d.dtype.itemsize
                         + x2d.size * itemsize
                         + n_splits * 8 * _LANES * 4)
    cost = pl.CostEstimate(flops=int(3 * rows * _LANES),
                           transcendentals=0,
                           bytes_accessed=bytes_accessed)

    partials = pl.pallas_call(
        kernel,
        out_shape=jax.ShapeDtypeStruct((n_splits, 8, _LANES), jnp.float32),
        grid_spec=pltpu.PrefetchScalarGridSpec(
            num_scalar_prefetch=0,
            grid=grid,
            in_specs=[big_spec, big_spec],
            out_specs=pl.BlockSpec((1, 8, _LANES), out_idx),
        ),
        compiler_params=pltpu.CompilerParams(
            dimension_semantics=dim_sem,
            vmem_limit_bytes=_VMEM_LIMIT_BYTES),
        cost_estimate=cost,
    )(recon2d, x2d)

    reconstruct_loss = jnp.sum(partials) * jnp.float32(inv_denom)

    # KLD term is tiny (B x latent): plain jnp in the wrapper keeps the kernel
    # a pure two-input, HBM-bandwidth-bound stream.
    lv = logvar.astype(jnp.float32)
    muf = mu.astype(jnp.float32)
    kld = jnp.sum(1.0 + lv - muf * muf - jnp.exp(lv))
    return reconstruct_loss - kld


def uvae_criterion_ref(recon_x, x, mu, logvar, x_sigma=1.0):
    batch_size = x.shape[0]
    rec = jnp.sum((recon_x.astype(jnp.float32) - x.astype(jnp.float32)) ** 2)
    rec = rec / (x_sigma ** 2 * batch_size)
    lv = logvar.astype(jnp.float32)
    mu = mu.astype(jnp.float32)
    kld = jnp.sum(1.0 + lv - mu ** 2 - jnp.exp(lv))
    return rec - kld


if __name__ == "__main__":
    key = jax.random.PRNGKey(0)
    k1, k2, k3, k4 = jax.random.split(key, 4)

    # Small shapes consistent with a VAE: NCHW images + latent vectors.
    B, C, H, W = 2, 4, 16, 16
    LATENT = 32

    x = jax.random.normal(k1, (B, C, H, W), dtype=jnp.float32)
    recon_x = jax.random.normal(k2, (B, C, H, W), dtype=jnp.float32)
    mu = jax.random.normal(k3, (B, LATENT), dtype=jnp.float32)
    logvar = 0.1 * jax.random.normal(k4, (B, LATENT), dtype=jnp.float32)

    loss = uvae_criterion(recon_x, x, mu, logvar, x_sigma=1.0)
    loss = jax.block_until_ready(loss)

    ref = uvae_criterion_ref(recon_x, x, mu, logvar, x_sigma=1.0)
    assert jnp.allclose(loss, ref, rtol=1e-5, atol=1e-5), (loss, ref)

    print("KERNEL_OK")
</pallas_src>

<mosaic_0001>
module attributes {stable_mosaic.version = 11 : i64} {
  func.func @_sq_diff_sum_kernel(%arg0: i32, %arg1: memref<16x128xf32, #tpu.memory_space<vmem>>, %arg2: memref<16x128xf32, #tpu.memory_space<vmem>>, %arg3: memref<1x8x128xf32, #tpu.memory_space<vmem>>) attributes {dimension_semantics = [#tpu.dimension_semantics<arbitrary>], iteration_bounds = array<i64: 1>, scalar_prefetch = 0 : i64, scratch_operands = 0 : i64, tpu.core_type = #tpu.core_type<tc>, window_params = [{transform_indices = @transform_0, window_bounds = array<i64: 16, 128>}, {transform_indices = @transform_1, window_bounds = array<i64: 16, 128>}, {pipeline_mode = #tpu.pipeline_mode<synchronous>, transform_indices = @transform_2, window_bounds = array<i64: 1, 8, 128>}]} {
    %c0_i32 = arith.constant 0 : i32
    %0 = arith.cmpi eq, %arg0, %c0_i32 : i32
    %1 = arith.extui %0 : i1 to i32
    %c0_i32_0 = arith.constant 0 : i32
    %2 = arith.cmpi ne, %1, %c0_i32_0 : i32
    scf.if %2 {
      %cst_10 = arith.constant 0.000000e+00 : f32
      %13 = vector.broadcast %cst_10 : f32 to vector<1x8x128xf32>
      %c0_11 = arith.constant 0 : index
      %c0_12 = arith.constant 0 : index
      %c0_13 = arith.constant 0 : index
      %14 = vector.load %arg3[%c0_11, %c0_12, %c0_13] : memref<1x8x128xf32, #tpu.memory_space<vmem>>, vector<1x8x128xf32>
      tpu.vector_store %arg3[%c0_11, %c0_12, %c0_13], %13 {strides = array<i32>} : memref<1x8x128xf32, #tpu.memory_space<vmem>>, vector<1x8x128xf32>,
    } else {
    }
    %c0 = arith.constant 0 : index
    %c0_1 = arith.constant 0 : index
    %3 = vector.load %arg1[%c0, %c0_1] : memref<16x128xf32, #tpu.memory_space<vmem>>, vector<16x128xf32>
    %c0_2 = arith.constant 0 : index
    %c0_3 = arith.constant 0 : index
    %4 = vector.load %arg2[%c0_2, %c0_3] : memref<16x128xf32, #tpu.memory_space<vmem>>, vector<16x128xf32>
    %5 = arith.subf %3, %4 : vector<16x128xf32>
    %6 = arith.mulf %5, %5 : vector<16x128xf32>
    %c0_4 = arith.constant 0 : index
    %c0_5 = arith.constant 0 : index
    %c0_6 = arith.constant 0 : index
    %7 = vector.load %arg3[%c0_4, %c0_5, %c0_6] : memref<1x8x128xf32, #tpu.memory_space<vmem>>, vector<1x8x128xf32>
    %8 = vector.shape_cast %6 : vector<16x128xf32> to vector<2x8x128xf32>
    %cst = arith.constant dense<0.000000e+00> : vector<8x128xf32>
    %9 = vector.multi_reduction <add>, %8, %cst [0] : vector<2x8x128xf32> to vector<8x128xf32>
    %10 = vector.shape_cast %9 : vector<8x128xf32> to vector<1x8x128xf32>
    %11 = arith.addf %7, %10 : vector<1x8x128xf32>
    %c0_7 = arith.constant 0 : index
    %c0_8 = arith.constant 0 : index
    %c0_9 = arith.constant 0 : index
    %12 = vector.load %arg3[%c0_7, %c0_8, %c0_9] : memref<1x8x128xf32, #tpu.memory_space<vmem>>, vector<1x8x128xf32>
    tpu.vector_store %arg3[%c0_7, %c0_8, %c0_9], %11 {strides = array<i32>} : memref<1x8x128xf32, #tpu.memory_space<vmem>>, vector<1x8x128xf32>,
    return
  }
  func.func @transform_0(%arg0: i32) -> (i32, i32) {
    %c0_i32 = arith.constant 0 : i32
    %c0_i32_0 = arith.constant 0 : i32
    return %arg0, %c0_i32 : i32, i32
  }
  func.func @transform_1(%arg0: i32) -> (i32, i32) {
    %c0_i32 = arith.constant 0 : i32
    %c0_i32_0 = arith.constant 0 : i32
    return %arg0, %c0_i32 : i32, i32
  }
  func.func @transform_2(%arg0: i32) -> (i32, i32, i32) {
    %c0_i32 = arith.constant 0 : i32
    %c0_i32_0 = arith.constant 0 : i32
    %c0_i32_1 = arith.constant 0 : i32
    %c0_i32_2 = arith.constant 0 : i32
    return %c0_i32, %c0_i32_0, %c0_i32_1 : i32, i32, i32
  }
}

</mosaic_0001>

<llo_original>
// kernel: tpu_custom_call.1
$region0: #{tpu_custom_call.1}
  #allocation0 [shape = 'u32[]', space=smem, size = 0x4, offset = 0x4, fixed_abs, tag = 'smem constant byte address 0x4 - core index']
  #allocation1 [shape = 'u32[144,128]{1,0:T(1,128)}', space=vmem, size = 0x12000, scoped, tag = 'internal scratch']
  %s0 = inlined_call_operand.hbm [shape: f32[16,128], index: 0, kind: input, shape index: {}]
  %s1 = inlined_call_operand.hbm [shape: f32[16,128], index: 1, kind: input, shape index: {}]
  %s2 = inlined_call_operand.hbm [shape: f32[1,8,128], index: 2, kind: output, shape index: {}]
  %s3 = sld [smem:[#allocation0]]
  $region30: #{tpu_custom_call.1} parent=0
    _
  %s5 = ssub.s32 1, %s3
  %s6 = scalar_select 0, %s5, %s3
  $region1: #{tpu_custom_call.1} parent=0
    #allocation2 [shape = 'u8[8192]{0}', space=vmem, size = 0x2000, scoped, tag = 'input window, operand 0, single buffered']
    #allocation3 [shape = 's32[1]{0}', space=sflag, size = 0x4, scoped, tag = 'scoped memory for tpu_custom_call.1']
    #allocation4 [shape = 's32[1]{0}', space=sflag, size = 0x4, scoped, tag = 'scoped memory for tpu_custom_call.1']
    #allocation5 [shape = 'u8[8192]{0}', space=vmem, size = 0x2000, scoped, tag = 'input window, operand 1, single buffered']
    #allocation6 [shape = 's32[1]{0}', space=sflag, size = 0x4, scoped, tag = 'scoped memory for tpu_custom_call.1']
    #allocation7 [shape = 'u8[4096]{0}', space=vmem, size = 0x1000, scoped, tag = 'output window, operand 0, single buffered']
    %7 = vsyncpa [#allocation3], 0
    %8 = vsyncpa [#allocation6], 0
    %9 = vsyncpa [#allocation4], 0
    // Predicated region
    $region2: #{tpu_custom_call.1} parent=1 // pred_check
      _
    $region3: #{tpu_custom_call.1} parent=1 // pred_check_branch
      %11 = sbr.rel (0) target = $region5
    $region4: #{tpu_custom_call.1} parent=1 // pred_region
      %s13 = ssub.s32 256, 256
      %14 = vsyncadd [#allocation3], %s13
      %s15 = sshll.u32 [#allocation2], 4
      %s16 = int_to_ptr.vmem [resolvable:$true] %s15
      %21 = dma.hbm_to_vmem [thread:$0]  %s0, 256, %s16, [#allocation3], 128, 128, 8
    $region5: #{tpu_custom_call.1} parent=1 // pred_fallthru
      _
    // Predicated region
    $region6: #{tpu_custom_call.1} parent=1 // pred_check
      _
    $region7: #{tpu_custom_call.1} parent=1 // pred_check_branch
      %23 = sbr.rel (0) target = $region9
    $region8: #{tpu_custom_call.1} parent=1 // pred_region
      %s25 = ssub.s32 256, 256
      %26 = vsyncadd [#allocation6], %s25
      %s27 = sshll.u32 [#allocation5], 4
      %s28 = int_to_ptr.vmem [resolvable:$true] %s27
      %33 = dma.hbm_to_vmem [thread:$0]  %s1, 256, %s28, [#allocation6], 128, 128, 8
    $region9: #{tpu_custom_call.1} parent=1 // pred_fallthru
      _
    // Predicated region
    $region10: #{tpu_custom_call.1} parent=1 // pred_check
      _
    $region11: #{tpu_custom_call.1} parent=1 // pred_check_branch
      %35 = sbr.rel (0) target = $region13
    $region12: #{tpu_custom_call.1} parent=1 // pred_region
      %36 = dma.done [#allocation3], 256
    $region13: #{tpu_custom_call.1} parent=1 // pred_fallthru
      _
    // Predicated region
    $region14: #{tpu_custom_call.1} parent=1 // pred_check
      _
    $region15: #{tpu_custom_call.1} parent=1 // pred_check_branch
      %38 = sbr.rel (0) target = $region17
    $region16: #{tpu_custom_call.1} parent=1 // pred_region
      %39 = dma.done [#allocation6], 256
    $region17: #{tpu_custom_call.1} parent=1 // pred_fallthru
      _
    %p40 = scmp.eq.s32.totalorder 0, 0
    // Predicated region
    $region18: #{tpu_custom_call.1} parent=1 // pred_check
      %p41 = pneg %p40
    $region19: #{tpu_custom_call.1} parent=1 // pred_check_branch
      %43 = sbr.rel (%p41) target = $region21
    $region20: #{tpu_custom_call.1} parent=1 // pred_region
      %44 = vst [vmem:[#allocation7] sm:$0xff] 0.0
    $region21: #{tpu_custom_call.1} parent=1 // pred_fallthru
      _
    %v45 = vld [vmem:[#allocation2] sm:$0xff]
    %v46 = vld [vmem:[#allocation2 + $0x8] sm:$0xff]
    %v47 = vld [vmem:[#allocation5] sm:$0xff]
    %v48 = vld [vmem:[#allocation5 + $0x8] sm:$0xff]
    %v49 = vsub.f32 %v45, %v47
    %v50 = vsub.f32 %v46, %v48
    %v51 = vmul.f32 %v49, %v49
    %v52 = vmul.f32 %v50, %v50
    %v53 = vld [vmem:[#allocation7] sm:$0xff]
    %v54 = vadd.f32 %v51, %v52
    %v55 = vadd.f32 %v53, %v54
    %56 = vst [vmem:[#allocation7] sm:$0xff] %v55
    // Predicated region
    $region22: #{tpu_custom_call.1} parent=1 // pred_check
      _
    $region23: #{tpu_custom_call.1} parent=1 // pred_check_branch
      %58 = sbr.rel (0) target = $region25
    $region24: #{tpu_custom_call.1} parent=1 // pred_region
      %s60 = ssub.s32 128, 128
      %61 = vsyncadd [#allocation4], %s60
      %s63 = sshll.u32 [#allocation7], 4
      %s64 = int_to_ptr.vmem [resolvable:$true] %s63
      %66 = dma.vmem_to_hbm [thread:$0]  %s64, 128, %s2, [#allocation4]
    $region25: #{tpu_custom_call.1} parent=1 // pred_fallthru
      _
    // Predicated region
    $region26: #{tpu_custom_call.1} parent=1 // pred_check
      _
    $region27: #{tpu_custom_call.1} parent=1 // pred_check_branch
      %68 = sbr.rel (0) target = $region29
    $region28: #{tpu_custom_call.1} parent=1 // pred_region
      %69 = dma.done [#allocation4], 128
    $region29: #{tpu_custom_call.1} parent=1 // pred_fallthru
      _
    %70 = vsyncpa [#allocation3], 1
    %71 = vsyncpa [#allocation6], 1
    %72 = vsyncpa [#allocation4], 1

</llo_original>
